<compile_context>
chip_gen: v7x
topology: tpu7x:2x2x1
jax: 0.10.0
libtpu: 0.0.40
codegen_flags: <defaults>
</compile_context>

<pallas_src>
import functools

import jax
import jax.numpy as jnp
from jax.experimental import pallas as pl
from jax.experimental.pallas import tpu as pltpu

LN_EPS = 1e-5  # PyTorch nn.LayerNorm default


def _round_up(n, m):
    return ((n + m - 1) // m) * m


def prenorm_kernel(x_ref, gamma_ref, beta_ref, w_ref, b_ref, o_ref, y_ref, *, d_true):
    """One (row-tile, dout-tile) grid step.

    x_ref:      (TILE_R, Dp)     input rows (re-used across j; constant block index)
    gamma/beta: (1, Dp)          LayerNorm params (VMEM resident)
    w_ref:      (Dp, TILE_N)     streamed column block of W^T
    b_ref:      (1, TILE_N)      bias column block
    o_ref:      (TILE_R, TILE_N) output block
    y_ref:      (TILE_R, Dp)     scratch: normalized rows, computed at j==0,
                                 reused for every column tile of this row tile.
    """
    j = pl.program_id(1)

    @pl.when(j == 0)
    def _():
        x = x_ref[...].astype(jnp.float32)
        inv_d = 1.0 / float(d_true)
        # Single-pass statistics: padded lanes are zero, so both sums are
        # already exact over the true feature dim (no lane mask needed).
        s1 = jnp.sum(x, axis=-1, keepdims=True)
        s2 = jnp.sum(x * x, axis=-1, keepdims=True)
        mean = s1 * inv_d
        var = jnp.maximum(s2 * inv_d - mean * mean, 0.0)
        x_hat = (x - mean) * jax.lax.rsqrt(var + LN_EPS)
        y = (x_hat * gamma_ref[...].astype(jnp.float32)
             + beta_ref[...].astype(jnp.float32))
        # gamma/beta padded lanes are zero -> padded lanes of y are zero.
        y_ref[...] = y.astype(y_ref.dtype)

    # fn: Linear -> y @ W^T (column block) + b; MXU in the weight's native
    # dtype, f32 accumulation.
    out = jnp.dot(y_ref[...], w_ref[...], preferred_element_type=jnp.float32)
    o_ref[...] = (out + b_ref[...].astype(jnp.float32)).astype(o_ref.dtype)


def prenorm_linear(x, gamma, beta, weight, bias):
    """x: (B, N, D); gamma/beta: (D,); weight: (D_out, D_in) PyTorch layout; bias: (D_out,)."""
    B, N, D = x.shape
    D_out = weight.shape[0]
    rows = B * N

    # ---- lane/sublane-aligned shapes --------------------------------------
    d_pad = _round_up(D, 128)
    # 256-wide output tiles keep the v6e/v7x (2x256x256) MXU columns full;
    # tiny heads stay at 128 (fine on v5e's 4x128x128, avoids padding blow-up).
    dout_pad = _round_up(D_out, 128) if D_out <= 128 else _round_up(D_out, 256)
    rows_pad = _round_up(rows, 8)

    tile_r = min(512, rows_pad)
    tile_n = 512 if dout_pad % 512 == 0 else (256 if dout_pad % 256 == 0 else 128)

    # ---- per-generation VMEM budget ---------------------------------------
    try:
        cap = int(pltpu.get_tpu_info().vmem_capacity_bytes)
    except Exception:
        cap = 64 << 20  # conservative fallback (v7x per-core VMEM)
    budget = int(cap * 0.75)  # ~48 MiB target on v7x, ~96 MiB on v5e/v6e

    x_isz = x.dtype.itemsize
    w_isz = weight.dtype.itemsize
    o_isz = x.dtype.itemsize

    def est(tr, tn):
        return (2 * tr * d_pad * x_isz        # x tile (double buffered)
                + 2 * d_pad * tn * w_isz      # streamed W block (double buffered)
                + 2 * tr * tn * o_isz         # out tile (double buffered)
                + tr * d_pad * w_isz          # normalized-row scratch
                + 3 * tr * d_pad * 4          # f32 LN intermediates
                + tr * tn * 4                 # f32 matmul accumulator
                + 2 * (2 * d_pad + tn) * 4)   # gamma/beta/bias (double buffered)

    while est(tile_r, tile_n) > budget and tile_r > 8:
        tile_r = max(8, _round_up(tile_r // 2, 8))
    if est(tile_r, tile_n) > budget and tile_n > 256:
        tile_n = 256

    vmem_limit = int(min(cap - (4 << 20),
                         max(est(tile_r, tile_n) + (8 << 20), 32 << 20)))

    # ---- conditional padding (skipped entirely for aligned shapes) --------
    x2 = x.reshape(rows, D)
    if rows_pad != rows or d_pad != D:
        x2 = jnp.pad(x2, ((0, rows_pad - rows), (0, d_pad - D)))
    gamma2, beta2 = gamma, beta
    if d_pad != D:
        gamma2 = jnp.pad(gamma, (0, d_pad - D))
        beta2 = jnp.pad(beta, (0, d_pad - D))
    gamma2 = gamma2.reshape(1, d_pad)
    beta2 = beta2.reshape(1, d_pad)
    w_t = weight.T  # (D_in, D_out): kernel computes y @ w_t == y @ W^T
    if d_pad != D or dout_pad != D_out:
        w_t = jnp.pad(w_t, ((0, d_pad - D), (0, dout_pad - D_out)))
    bias2 = bias if dout_pad == D_out else jnp.pad(bias, (0, dout_pad - D_out))
    bias2 = bias2.reshape(1, dout_pad)

    grid = (pl.cdiv(rows_pad, tile_r), dout_pad // tile_n)
    kernel = functools.partial(prenorm_kernel, d_true=D)

    out = pl.pallas_call(
        kernel,
        out_shape=jax.ShapeDtypeStruct((rows_pad, dout_pad), x.dtype),
        grid_spec=pltpu.PrefetchScalarGridSpec(
            num_scalar_prefetch=0,
            grid=grid,
            in_specs=[
                pl.BlockSpec((tile_r, d_pad), lambda i, j: (i, 0)),    # x rows
                pl.BlockSpec((1, d_pad), lambda i, j: (0, 0)),         # gamma
                pl.BlockSpec((1, d_pad), lambda i, j: (0, 0)),         # beta
                pl.BlockSpec((d_pad, tile_n), lambda i, j: (0, j)),    # W^T block (streamed)
                pl.BlockSpec((1, tile_n), lambda i, j: (0, j)),        # bias block
            ],
            out_specs=pl.BlockSpec((tile_r, tile_n), lambda i, j: (i, j)),
            scratch_shapes=[pltpu.VMEM((tile_r, d_pad), w_t.dtype)],   # normalized rows
        ),
        compiler_params=pltpu.CompilerParams(
            dimension_semantics=("parallel", "arbitrary"),
            vmem_limit_bytes=vmem_limit,
        ),
    )(x2, gamma2, beta2, w_t, bias2)

    if rows_pad != rows or dout_pad != D_out:
        out = out[:rows, :D_out]
    return out.reshape(B, N, D_out)


def prenorm_linear_ref(x, gamma, beta, weight, bias):
    xf = x.astype(jnp.float32)
    mean = jnp.mean(xf, axis=-1, keepdims=True)
    var = jnp.mean((xf - mean) ** 2, axis=-1, keepdims=True)
    y = (xf - mean) / jnp.sqrt(var + LN_EPS) * gamma + beta
    return (y @ weight.T.astype(jnp.float32) + bias).astype(x.dtype)


if __name__ == "__main__":
    key = jax.random.PRNGKey(0)
    B, N, D = 2, 8, 32  # batch, seq, hidden (dim)

    k_x, k_g, k_b, k_w, k_wb = jax.random.split(key, 5)
    x = jax.random.normal(k_x, (B, N, D), dtype=jnp.float32)

    # LayerNorm params (PyTorch init: gamma=1, beta=0; perturbed deterministically)
    gamma = jnp.ones((D,), jnp.float32) + 0.01 * jax.random.normal(k_g, (D,), jnp.float32)
    beta = 0.01 * jax.random.normal(k_b, (D,), jnp.float32)

    # fn = Linear(D, D), deterministic init, PyTorch (out, in) layout
    # TODO(synk): PreNorm's `fn` is an arbitrary sub-module; only a Linear head
    # is fused here — other fns would need their own kernels.
    weight = 0.1 * jax.random.normal(k_w, (D, D), jnp.float32)
    bias = 0.1 * jax.random.normal(k_wb, (D,), jnp.float32)
    D_out = weight.shape[0]

    out = prenorm_linear(x, gamma, beta, weight, bias)
    out = jax.block_until_ready(out)

    ref = prenorm_linear_ref(x, gamma, beta, weight, bias)
    assert out.shape == (B, N, D_out)
    assert jnp.allclose(out, ref, atol=1e-4, rtol=1e-4), "mismatch vs reference"

    print("KERNEL_OK")
</pallas_src>

<mosaic_0001>
module attributes {stable_mosaic.version = 11 : i64} {
  func.func @prenorm_kernel(%arg0: i32, %arg1: i32, %arg2: memref<16x128xf32, #tpu.memory_space<vmem>>, %arg3: memref<1x128xf32, #tpu.memory_space<vmem>>, %arg4: memref<1x128xf32, #tpu.memory_space<vmem>>, %arg5: memref<128x128xf32, #tpu.memory_space<vmem>>, %arg6: memref<1x128xf32, #tpu.memory_space<vmem>>, %arg7: memref<16x128xf32, #tpu.memory_space<vmem>>, %arg8: memref<16x128xf32, #tpu.memory_space<vmem>>) attributes {dimension_semantics = [#tpu.dimension_semantics<parallel>, #tpu.dimension_semantics<arbitrary>], iteration_bounds = array<i64: 1, 1>, scalar_prefetch = 0 : i64, scratch_operands = 1 : i64, tpu.core_type = #tpu.core_type<tc>, window_params = [{transform_indices = @transform_0, window_bounds = array<i64: 16, 128>}, {pipeline_mode = #tpu.pipeline_mode<synchronous>, transform_indices = @transform_1, window_bounds = array<i64: 1, 128>}, {pipeline_mode = #tpu.pipeline_mode<synchronous>, transform_indices = @transform_2, window_bounds = array<i64: 1, 128>}, {transform_indices = @transform_3, window_bounds = array<i64: 128, 128>}, {transform_indices = @transform_4, window_bounds = array<i64: 1, 128>}, {transform_indices = @transform_5, window_bounds = array<i64: 16, 128>}]} {
    %c0_i32 = arith.constant 0 : i32
    %0 = arith.cmpi eq, %arg1, %c0_i32 : i32
    %1 = arith.extui %0 : i1 to i32
    %c0_i32_0 = arith.constant 0 : i32
    %2 = arith.cmpi ne, %1, %c0_i32_0 : i32
    scf.if %2 {
      %c0_8 = arith.constant 0 : index
      %c0_9 = arith.constant 0 : index
      %10 = vector.load %arg2[%c0_8, %c0_9] : memref<16x128xf32, #tpu.memory_space<vmem>>, vector<16x128xf32>
      %cst_10 = arith.constant dense<0.000000e+00> : vector<16xf32>
      %11 = vector.multi_reduction <add>, %10, %cst_10 [1] : vector<16x128xf32> to vector<16xf32>
      %12 = vector.shape_cast %11 : vector<16xf32> to vector<16x1xf32>
      %13 = arith.mulf %10, %10 : vector<16x128xf32>
      %cst_11 = arith.constant dense<0.000000e+00> : vector<16xf32>
      %14 = vector.multi_reduction <add>, %13, %cst_11 [1] : vector<16x128xf32> to vector<16xf32>
      %15 = vector.shape_cast %14 : vector<16xf32> to vector<16x1xf32>
      %cst_12 = arith.constant 3.125000e-02 : f32
      %16 = vector.broadcast %cst_12 : f32 to vector<16x1xf32>
      %17 = arith.mulf %12, %16 : vector<16x1xf32>
      %cst_13 = arith.constant 3.125000e-02 : f32
      %18 = vector.broadcast %cst_13 : f32 to vector<16x1xf32>
      %19 = arith.mulf %15, %18 : vector<16x1xf32>
      %20 = arith.mulf %17, %17 : vector<16x1xf32>
      %21 = arith.subf %19, %20 : vector<16x1xf32>
      %cst_14 = arith.constant 0.000000e+00 : f32
      %22 = vector.broadcast %cst_14 : f32 to vector<16x1xf32>
      %23 = arith.maximumf %21, %22 : vector<16x1xf32>
      %24 = vector.broadcast %17 : vector<16x1xf32> to vector<16x128xf32>
      %25 = arith.subf %10, %24 : vector<16x128xf32>
      %cst_15 = arith.constant 9.99999974E-6 : f32
      %26 = vector.broadcast %cst_15 : f32 to vector<16x1xf32>
      %27 = arith.addf %23, %26 : vector<16x1xf32>
      %28 = math.rsqrt %27 : vector<16x1xf32>
      %29 = vector.broadcast %28 : vector<16x1xf32> to vector<16x128xf32>
      %30 = arith.mulf %25, %29 : vector<16x128xf32>
      %c0_16 = arith.constant 0 : index
      %c0_17 = arith.constant 0 : index
      %31 = vector.load %arg3[%c0_16, %c0_17] : memref<1x128xf32, #tpu.memory_space<vmem>>, vector<1x128xf32>
      %32 = vector.broadcast %31 : vector<1x128xf32> to vector<16x128xf32>
      %33 = arith.mulf %30, %32 : vector<16x128xf32>
      %c0_18 = arith.constant 0 : index
      %c0_19 = arith.constant 0 : index
      %34 = vector.load %arg4[%c0_18, %c0_19] : memref<1x128xf32, #tpu.memory_space<vmem>>, vector<1x128xf32>
      %35 = vector.broadcast %34 : vector<1x128xf32> to vector<16x128xf32>
      %36 = arith.addf %33, %35 : vector<16x128xf32>
      %c0_20 = arith.constant 0 : index
      %c0_21 = arith.constant 0 : index
      %37 = vector.load %arg8[%c0_20, %c0_21] : memref<16x128xf32, #tpu.memory_space<vmem>>, vector<16x128xf32>
      tpu.vector_store %arg8[%c0_20, %c0_21], %36 {strides = array<i32>} : memref<16x128xf32, #tpu.memory_space<vmem>>, vector<16x128xf32>,
    } else {
    }
    %c0 = arith.constant 0 : index
    %c0_1 = arith.constant 0 : index
    %3 = vector.load %arg8[%c0, %c0_1] : memref<16x128xf32, #tpu.memory_space<vmem>>, vector<16x128xf32>
    %c0_2 = arith.constant 0 : index
    %c0_3 = arith.constant 0 : index
    %4 = vector.load %arg5[%c0_2, %c0_3] : memref<128x128xf32, #tpu.memory_space<vmem>>, vector<128x128xf32>
    %cst = arith.constant dense<0.000000e+00> : vector<16x128xf32>
    %5 = tpu.matmul %3, %4, %cst {dimension_numbers = #tpu.dot_dimension_numbers<[1], [0], [0], [1], [0, 0, 1, 1], [], []>} : vector<16x128xf32>, vector<128x128xf32>, vector<16x128xf32> -> vector<16x128xf32>
    %c0_4 = arith.constant 0 : index
    %c0_5 = arith.constant 0 : index
    %6 = vector.load %arg6[%c0_4, %c0_5] : memref<1x128xf32, #tpu.memory_space<vmem>>, vector<1x128xf32>
    %7 = vector.broadcast %6 : vector<1x128xf32> to vector<16x128xf32>
    %8 = arith.addf %5, %7 : vector<16x128xf32>
    %c0_6 = arith.constant 0 : index
    %c0_7 = arith.constant 0 : index
    %9 = vector.load %arg7[%c0_6, %c0_7] : memref<16x128xf32, #tpu.memory_space<vmem>>, vector<16x128xf32>
    tpu.vector_store %arg7[%c0_6, %c0_7], %8 {strides = array<i32>} : memref<16x128xf32, #tpu.memory_space<vmem>>, vector<16x128xf32>,
    return
  }
  func.func @transform_0(%arg0: i32, %arg1: i32) -> (i32, i32) {
    %c0_i32 = arith.constant 0 : i32
    %c0_i32_0 = arith.constant 0 : i32
    return %arg0, %c0_i32 : i32, i32
  }
  func.func @transform_1(%arg0: i32, %arg1: i32) -> (i32, i32) {
    %c0_i32 = arith.constant 0 : i32
    %c0_i32_0 = arith.constant 0 : i32
    %c0_i32_1 = arith.constant 0 : i32
    return %c0_i32, %c0_i32_0 : i32, i32
  }
  func.func @transform_2(%arg0: i32, %arg1: i32) -> (i32, i32) {
    %c0_i32 = arith.constant 0 : i32
    %c0_i32_0 = arith.constant 0 : i32
    %c0_i32_1 = arith.constant 0 : i32
    return %c0_i32, %c0_i32_0 : i32, i32
  }
  func.func @transform_3(%arg0: i32, %arg1: i32) -> (i32, i32) {
    %c0_i32 = arith.constant 0 : i32
    %c0_i32_0 = arith.constant 0 : i32
    return %c0_i32, %arg1 : i32, i32
  }
  func.func @transform_4(%arg0: i32, %arg1: i32) -> (i32, i32) {
    %c0_i32 = arith.constant 0 : i32
    %c0_i32_0 = arith.constant 0 : i32
    return %c0_i32, %arg1 : i32, i32
  }
  func.func @transform_5(%arg0: i32, %arg1: i32) -> (i32, i32) {
    %c0_i32 = arith.constant 0 : i32
    return %arg0, %arg1 : i32, i32
  }
}

</mosaic_0001>

<llo_original>
// kernel: tpu_custom_call.1
$region0: #{tpu_custom_call.1}
  #allocation0 [shape = 'u32[]', space=smem, size = 0x4, offset = 0x4, fixed_abs, tag = 'smem constant byte address 0x4 - core index']
  #allocation1 [shape = 'u32[144,128]{1,0:T(1,128)}', space=vmem, size = 0x12000, scoped, tag = 'internal scratch']
  #allocation2 [shape = 'f32[16,128]{1,0:T(8,128)}', space=vmem, size = 0x2000, scoped, tag = 'scratch operand']
  %s0 = inlined_call_operand.hbm [shape: f32[16,128], index: 0, kind: input, shape index: {}]
  %s1 = inlined_call_operand.vmem [shape: f32[1,128], index: 1, kind: input, shape index: {}]
  %s2 = inlined_call_operand.vmem [shape: f32[1,128], index: 2, kind: input, shape index: {}]
  %s3 = inlined_call_operand.hbm [shape: f32[128,128], index: 3, kind: input, shape index: {}]
  %s4 = inlined_call_operand.vmem [shape: f32[1,128], index: 4, kind: input, shape index: {}]
  %s5 = inlined_call_operand.hbm [shape: f32[16,128], index: 5, kind: output, shape index: {}]
  %s6 = sld [smem:[#allocation0]]
  $region42: #{tpu_custom_call.1} parent=0
    _
  %s8 = ssub.s32 1, %s6
  %s9 = scalar_select 0, %s8, %s6
  $region1: #{tpu_custom_call.1} parent=0
    #allocation3 [shape = 'u8[8192]{0}', space=vmem, size = 0x2000, scoped, tag = 'input window, operand 0, single buffered']
    #allocation4 [shape = 's32[1]{0}', space=sflag, size = 0x4, scoped, tag = 'scoped memory for tpu_custom_call.1']
    #allocation5 [shape = 's32[1]{0}', space=sflag, size = 0x4, scoped, tag = 'scoped memory for tpu_custom_call.1']
    #allocation6 [shape = 'u8[65536]{0}', space=vmem, size = 0x10000, scoped, tag = 'input window, operand 3, single buffered']
    #allocation7 [shape = 's32[1]{0}', space=sflag, size = 0x4, scoped, tag = 'scoped memory for tpu_custom_call.1']
    #allocation8 [shape = 'u8[8192]{0}', space=vmem, size = 0x2000, scoped, tag = 'output window, operand 0, single buffered']
    %10 = vsyncpa [#allocation4], 0
    %11 = vsyncpa [#allocation7], 0
    %12 = vsyncpa [#allocation5], 0
    // Predicated region
    $region2: #{tpu_custom_call.1} parent=1 // pred_check
      _
    $region3: #{tpu_custom_call.1} parent=1 // pred_check_branch
      %14 = sbr.rel (0) target = $region5
    $region4: #{tpu_custom_call.1} parent=1 // pred_region
      %s16 = ssub.s32 256, 256
      %17 = vsyncadd [#allocation4], %s16
      %s18 = sshll.u32 [#allocation3], 4
      %s19 = int_to_ptr.vmem [resolvable:$true] %s18
      %24 = dma.hbm_to_vmem [thread:$0]  %s0, 256, %s19, [#allocation4], 128, 128, 8
    $region5: #{tpu_custom_call.1} parent=1 // pred_fallthru
      _
    // Predicated region
    $region6: #{tpu_custom_call.1} parent=1 // pred_check
      _
    $region7: #{tpu_custom_call.1} parent=1 // pred_check_branch
      %26 = sbr.rel (0) target = $region9
    $region8: #{tpu_custom_call.1} parent=1 // pred_region
      _
    $region9: #{tpu_custom_call.1} parent=1 // pred_fallthru
      _
    // Predicated region
    $region10: #{tpu_custom_call.1} parent=1 // pred_check
      _
    $region11: #{tpu_custom_call.1} parent=1 // pred_check_branch
      %28 = sbr.rel (0) target = $region13
    $region12: #{tpu_custom_call.1} parent=1 // pred_region
      _
    $region13: #{tpu_custom_call.1} parent=1 // pred_fallthru
      _
    // Predicated region
    $region14: #{tpu_custom_call.1} parent=1 // pred_check
      _
    $region15: #{tpu_custom_call.1} parent=1 // pred_check_branch
      %30 = sbr.rel (0) target = $region17
    $region16: #{tpu_custom_call.1} parent=1 // pred_region
      %s32 = ssub.s32 2048, 2048
      %33 = vsyncadd [#allocation7], %s32
      %s34 = sshll.u32 [#allocation6], 4
      %s35 = int_to_ptr.vmem [resolvable:$true] %s34
      %40 = dma.hbm_to_vmem [thread:$0]  %s3, 2048, %s35, [#allocation7], 128, 128, 8
    $region17: #{tpu_custom_call.1} parent=1 // pred_fallthru
      _
    // Predicated region
    $region18: #{tpu_custom_call.1} parent=1 // pred_check
      _
    $region19: #{tpu_custom_call.1} parent=1 // pred_check_branch
      %42 = sbr.rel (0) target = $region21
    $region20: #{tpu_custom_call.1} parent=1 // pred_region
      _
    $region21: #{tpu_custom_call.1} parent=1 // pred_fallthru
      _
    // Predicated region
    $region22: #{tpu_custom_call.1} parent=1 // pred_check
      _
    $region23: #{tpu_custom_call.1} parent=1 // pred_check_branch
      %44 = sbr.rel (0) target = $region25
    $region24: #{tpu_custom_call.1} parent=1 // pred_region
      %45 = dma.done [#allocation4], 256
    $region25: #{tpu_custom_call.1} parent=1 // pred_fallthru
      _
    // Predicated region
    $region26: #{tpu_custom_call.1} parent=1 // pred_check
      _
    $region27: #{tpu_custom_call.1} parent=1 // pred_check_branch
      %47 = sbr.rel (0) target = $region29
    $region28: #{tpu_custom_call.1} parent=1 // pred_region
      %48 = dma.done [#allocation7], 2048
    $region29: #{tpu_custom_call.1} parent=1 // pred_fallthru
      _
    %p49 = scmp.eq.s32.totalorder 0, 0
    // Predicated region
    $region30: #{tpu_custom_call.1} parent=1 // pred_check
      %p50 = pneg %p49
    $region31: #{tpu_custom_call.1} parent=1 // pred_check_branch
      %52 = sbr.rel (%p50) target = $region33
    $region32: #{tpu_custom_call.1} parent=1 // pred_region
      %v53 = vld [vmem:[#allocation3] sm:$0xff]
      %v54 = vld [vmem:[#allocation3 + $0x8] sm:$0xff]
      %55 = vadd.xlane.f32.xlu0 %v53
      %v56 = vpop.xlane.xlu0 %55
      %57 = vadd.xlane.f32.xlu0 %v54
      %v58 = vpop.xlane.xlu0 %57
      %v59 = vmul.f32 %v53, %v53
      %v60 = vmul.f32 %v54, %v54
      %61 = vadd.xlane.f32.xlu0 %v59
      %v62 = vpop.xlane.xlu0 %61
      %63 = vadd.xlane.f32.xlu0 %v60
      %v64 = vpop.xlane.xlu0 %63
      %v65 = vmul.f32 %v56, 0.03125
      %v66 = vmul.f32 %v58, 0.03125
      %v67 = vmul.f32 %v62, 0.03125
      %v68 = vmul.f32 %v64, 0.03125
      %v69 = vmul.f32 %v65, %v65
      %v70 = vmul.f32 %v66, %v66
      %v71 = vsub.f32 %v67, %v69
      %v72 = vsub.f32 %v68, %v70
      %v73 = vmax.f32 %v71, 0.0
      %v74 = vmax.f32 %v72, 0.0
      %v75 = vsub.f32 %v53, %v65
      %v76 = vsub.f32 %v54, %v66
      %v77 = vadd.f32 %v73, 1e-05
      %v78 = vadd.f32 %v74, 1e-05
      %v79 = vrsqrt.pop %v77
      %v80 = vrsqrt.pop %v78
      %v81 = vmul.f32 %v75, %v79
      %v82 = vmul.f32 %v76, %v80
      %v83 = vld [vmem:[%s1] sm:$0x1]
      %v85 = vlaneseq
      %v86 = vshrl.u32 %v85, 7
      %v87 = vsub.s32 0, %v86
      %v88 = vrot.slane %v83, %v87
      %v90 = vmul.f32 %v81, %v88
      %v91 = vmul.f32 %v82, %v88
      %v92 = vld [vmem:[%s2] sm:$0x1]
      %v94 = vlaneseq
      %v95 = vshrl.u32 %v94, 7
      %v96 = vsub.s32 0, %v95
      %v97 = vrot.slane %v92, %v96
      %v99 = vadd.f32 %v90, %v97
      %v100 = vadd.f32 %v91, %v97
      %101 = vst [vmem:[#allocation2] sm:$0xff] %v99
      %102 = vst [vmem:[#allocation2 + $0x8] sm:$0xff] %v100
    $region33: #{tpu_custom_call.1} parent=1 // pred_fallthru
      _
    %v103 = vld [vmem:[#allocation2] sm:$0xff]
    %v104 = vld [vmem:[#allocation2 + $0x8] sm:$0xff]
    %v105 = vld [vmem:[#allocation6] sm:$0xff]
    %v106 = vld [vmem:[#allocation6 + $0x8] sm:$0xff]
    %v107 = vld [vmem:[#allocation6 + $0x10] sm:$0xff]
    %v108 = vld [vmem:[#allocation6 + $0x18] sm:$0xff]
    %v109 = vld [vmem:[#allocation6 + $0x20] sm:$0xff]
    %v110 = vld [vmem:[#allocation6 + $0x28] sm:$0xff]
    %v111 = vld [vmem:[#allocation6 + $0x30] sm:$0xff]
    %v112 = vld [vmem:[#allocation6 + $0x38] sm:$0xff]
    %v113 = vld [vmem:[#allocation6 + $0x40] sm:$0xff]
    %v114 = vld [vmem:[#allocation6 + $0x48] sm:$0xff]
    %v115 = vld [vmem:[#allocation6 + $0x50] sm:$0xff]
    %v116 = vld [vmem:[#allocation6 + $0x58] sm:$0xff]
    %v117 = vld [vmem:[#allocation6 + $0x60] sm:$0xff]
    %v118 = vld [vmem:[#allocation6 + $0x68] sm:$0xff]
    %v119 = vld [vmem:[#allocation6 + $0x70] sm:$0xff]
    %v120 = vld [vmem:[#allocation6 + $0x78] sm:$0xff]
    %v121 = vld [vmem:[%s4] sm:$0x1]
    %v123 = vlaneseq
    %v124 = vshrl.u32 %v123, 7
    %v125 = vsub.s32 0, %v124
    %v126 = vrot.slane %v121, %v125
    %128 = vmatprep.subr.mxu0 0.0
    %129 = vmatpush1.msra.mxu0 %v105
    %130 = vmatprep.subr.mxu0 0.0
    %131 = vmatpush1.msra.mxu0 %v106
    %132 = vmatprep.subr.mxu0 0.0
    %133 = vmatpush1.msra.mxu0 %v107
    %134 = vmatprep.subr.mxu0 0.0
    %135 = vmatpush1.msra.mxu0 %v108
    %136 = vmatprep.subr.mxu0 0.0
    %137 = vmatpush1.msra.mxu0 %v109
    %138 = vmatprep.subr.mxu0 0.0
    %139 = vmatpush1.msra.mxu0 %v110
    %140 = vmatprep.subr.mxu0 0.0
    %141 = vmatpush1.msra.mxu0 %v111
    %142 = vmatprep.subr.mxu0 0.0
    %143 = vmatpush1.msra.mxu0 %v112
    %144 = vmatprep.subr.mxu0 0.0
    %145 = vmatpush1.msra.mxu0 %v113
    %146 = vmatprep.subr.mxu0 0.0
    %147 = vmatpush1.msra.mxu0 %v114
    %148 = vmatprep.subr.mxu0 0.0
    %149 = vmatpush1.msra.mxu0 %v115
    %150 = vmatprep.subr.mxu0 0.0
    %151 = vmatpush1.msra.mxu0 %v116
    %152 = vmatprep.subr.mxu0 0.0
    %153 = vmatpush1.msra.mxu0 %v117
    %154 = vmatprep.subr.mxu0 0.0
    %155 = vmatpush1.msra.mxu0 %v118
    %156 = vmatprep.subr.mxu0 0.0
    %157 = vmatpush1.msra.mxu0 %v119
    %158 = vmatprep.subr.mxu0 0.0
    %159 = vmatpush1.msra.mxu0 %v120
    %160 = vmatprep.subr.mxu0 0.0
    %161 = vmatpush1.msra.mxu0 0.0
    %162 = vmatprep.subr.mxu0 0.0
    %163 = vmatpush1.msra.mxu0 0.0
    %164 = vmatprep.subr.mxu0 0.0
    %165 = vmatpush1.msra.mxu0 0.0
    %166 = vmatprep.subr.mxu0 0.0
    %167 = vmatpush1.msra.mxu0 0.0
    %168 = vmatprep.subr.mxu0 0.0
    %169 = vmatpush1.msra.mxu0 0.0
    %170 = vmatprep.subr.mxu0 0.0
    %171 = vmatpush1.msra.mxu0 0.0
    %172 = vmatprep.subr.mxu0 0.0
    %173 = vmatpush1.msra.mxu0 0.0
    %174 = vmatprep.subr.mxu0 0.0
    %175 = vmatpush1.msra.mxu0 0.0
    %176 = vmatprep.subr.mxu0 0.0
    %177 = vmatpush1.msra.mxu0 0.0
    %178 = vmatprep.subr.mxu0 0.0
    %179 = vmatpush1.msra.mxu0 0.0
    %180 = vmatprep.subr.mxu0 0.0
    %181 = vmatpush1.msra.mxu0 0.0
    %182 = vmatprep.subr.mxu0 0.0
    %183 = vmatpush1.msra.mxu0 0.0
    %184 = vmatprep.subr.mxu0 0.0
    %185 = vmatpush1.msra.mxu0 0.0
    %186 = vmatprep.subr.mxu0 0.0
    %187 = vmatpush1.msra.mxu0 0.0
    %188 = vmatprep.subr.mxu0 0.0
    %189 = vmatpush1.msra.mxu0 0.0
    %190 = vmatprep.subr.mxu0 0.0
    %191 = vmatpush1.msra.mxu0 0.0
    %192 = vmatprep.mubr.f32.mxu0 0.0
    %193 = vmatmul.mubr.f32.gmra.mrb[0].mxu0 %v103
    %v194 = vpop.f32.mrb[0].mxu0
    %v195 = vadd.f32 %v126, %v194
    %v196 = vpop.f32.mrb[0].mxu0
    %197 = vmatprep.mubr.f32.mxu0 0.0
    %198 = vmatmul.mubr.f32.gmra.mrb[0].mxu0 %v104
    %v199 = vpop.f32.mrb[0].mxu0
    %v200 = vadd.f32 %v126, %v199
    %v201 = vpop.f32.mrb[0].mxu0
    %202 = vdwg.mxu0
    %203 = vst [vmem:[#allocation8] sm:$0xff] %v195
    %204 = vst [vmem:[#allocation8 + $0x8] sm:$0xff] %v200
    // Predicated region
    $region34: #{tpu_custom_call.1} parent=1 // pred_check
      _
    $region35: #{tpu_custom_call.1} parent=1 // pred_check_branch
      %206 = sbr.rel (0) target = $region37
    $region36: #{tpu_custom_call.1} parent=1 // pred_region
      %s208 = ssub.s32 256, 256
      %209 = vsyncadd [#allocation5], %s208
      %s210 = sshll.u32 [#allocation8], 4
      %s211 = int_to_ptr.vmem [resolvable:$true] %s210
      %216 = dma.vmem_to_hbm [thread:$0]  %s211, 256, %s5, [#allocation5], 128, 128, 8
    $region37: #{tpu_custom_call.1} parent=1 // pred_fallthru
      _
    // Predicated region
    $region38: #{tpu_custom_call.1} parent=1 // pred_check
      _
    $region39: #{tpu_custom_call.1} parent=1 // pred_check_branch
      %218 = sbr.rel (0) target = $region41
    $region40: #{tpu_custom_call.1} parent=1 // pred_region
      %219 = dma.done [#allocation5], 256
    $region41: #{tpu_custom_call.1} parent=1 // pred_fallthru
      _
    %220 = vsyncpa [#allocation4], 1
    %221 = vsyncpa [#allocation7], 1
    %222 = vsyncpa [#allocation5], 1

</llo_original>
